<compile_context>
chip_gen: v5e
topology: v5e:2x2
jax: 0.10.0
libtpu: 0.0.40
codegen_flags: <defaults>
</compile_context>

<pallas_src>
import jax
import jax.numpy as jnp
from jax.experimental import pallas as pl
from jax.experimental.pallas import tpu as pltpu


def _spatial_gate_kernel(x_ref, w1t_ref, b1_ref, w2_ref, b2_ref, o_ref):
    # x_ref  : (1, C, HW)  one batch element; channels on sublanes, H*W on lanes
    # w1t_ref: (C, Cr)     first 1x1-conv weight, transposed to channel-major
    # b1_ref : (1, Cr)
    # w2_ref : (C, Cr)     second 1x1-conv weight (PyTorch (C, Cr) layout)
    # b2_ref : (C, 1)
    # o_ref  : (1, C, HW)
    _, C, HW = x_ref.shape

    x = x_ref[0].astype(jnp.float32)                          # (C, HW)

    # Global average pool over spatial positions (lane-axis reduction, XLU).
    m = jnp.sum(x, axis=-1, keepdims=True) * (1.0 / HW)       # (C, 1)

    # fc1: h[j] = sum_c W1[j, c] * m[c] + b1[j]
    #   -> lane-broadcast multiply + sublane reduction (no tiny MXU dot).
    h = jnp.sum(w1t_ref[...] * m, axis=0, keepdims=True) + b1_ref[...]   # (1, Cr)
    h = jnp.maximum(h, 0.0)                                   # ReLU

    # fc2: g[c] = sum_j W2[c, j] * h[j] + b2[c]
    #   -> sublane-broadcast multiply + lane reduction.
    g = jnp.sum(w2_ref[...] * h, axis=1, keepdims=True) + b2_ref[...]    # (C, 1)
    g = 1.0 / (1.0 + jnp.exp(-g))                             # sigmoid (EUP)

    # Per-channel gate broadcast across the lane (spatial) axis; lane-dense store.
    o_ref[0] = (x * g).astype(o_ref.dtype)


def spatial_gate_pallas(x, w1, b1, w2, b2):
    """SpatialGate2d forward.

    x : (N, C, H, W)
    w1: (Cr, C, 1, 1), b1: (Cr,)   -- Conv2d(C, C//reduction, 1)
    w2: (C, Cr, 1, 1), b2: (C,)    -- Conv2d(C//reduction, C, 1)
    Returns (N, C, H, W), matching the PyTorch module.
    """
    N, C, H, W = x.shape
    Cr = w1.shape[0]
    HW = H * W

    x2 = x.reshape(N, C, HW)                          # contiguous merge -> free
    w1t = jnp.transpose(w1.reshape(Cr, C), (1, 0))    # (C, Cr)
    b1r = b1.reshape(1, Cr)
    w2m = w2.reshape(C, Cr)
    b2c = b2.reshape(C, 1)

    out = pl.pallas_call(
        _spatial_gate_kernel,
        out_shape=jax.ShapeDtypeStruct((N, C, HW), x.dtype),
        grid_spec=pltpu.PrefetchScalarGridSpec(
            num_scalar_prefetch=0,
            grid=(N,),
            in_specs=[
                pl.BlockSpec((1, C, HW), lambda n: (n, 0, 0)),
                pl.BlockSpec((C, Cr), lambda n: (0, 0)),
                pl.BlockSpec((1, Cr), lambda n: (0, 0)),
                pl.BlockSpec((C, Cr), lambda n: (0, 0)),
                pl.BlockSpec((C, 1), lambda n: (0, 0)),
            ],
            out_specs=pl.BlockSpec((1, C, HW), lambda n: (n, 0, 0)),
        ),
        compiler_params=pltpu.CompilerParams(
            dimension_semantics=("parallel",),
            vmem_limit_bytes=64 * 1024 * 1024,
        ),
    )(x2, w1t, b1r, w2m, b2c)

    return out.reshape(N, C, H, W)


def _reference_spatial_gate(x, w1, b1, w2, b2):
    """Pure-JAX reference matching the PyTorch module semantics."""
    N, C, H, W = x.shape
    Cr = w1.shape[0]
    y = jnp.mean(x, axis=(2, 3))                                       # (N, C)
    y = jnp.einsum("oc,nc->no", w1.reshape(Cr, C), y) + b1[None, :]    # (N, Cr)
    y = jnp.maximum(y, 0.0)
    y = jnp.einsum("oc,nc->no", w2.reshape(C, Cr), y) + b2[None, :]    # (N, C)
    y = jax.nn.sigmoid(y)
    return x * y[:, :, None, None]


if __name__ == "__main__":
    key = jax.random.PRNGKey(0)
    k_x, k_w1, k_b1, k_w2, k_b2 = jax.random.split(key, 5)

    # Small shapes consistent with the module: reduction=16 needs C >= 16.
    N, C, H, W = 2, 32, 16, 16
    reduction = 16
    Cr = C // reduction

    x = jax.random.normal(k_x, (N, C, H, W), dtype=jnp.float32)

    # nn.Conv2d default init: uniform(+-1/sqrt(fan_in)), fan_in = Cin * kh * kw.
    bound1 = 1.0 / (C ** 0.5)
    w1 = jax.random.uniform(k_w1, (Cr, C, 1, 1), minval=-bound1, maxval=bound1,
                            dtype=jnp.float32)
    b1 = jax.random.uniform(k_b1, (Cr,), minval=-bound1, maxval=bound1,
                            dtype=jnp.float32)
    bound2 = 1.0 / (Cr ** 0.5)
    w2 = jax.random.uniform(k_w2, (C, Cr, 1, 1), minval=-bound2, maxval=bound2,
                            dtype=jnp.float32)
    b2 = jax.random.uniform(k_b2, (C,), minval=-bound2, maxval=bound2,
                            dtype=jnp.float32)

    out = spatial_gate_pallas(x, w1, b1, w2, b2)
    out = jax.block_until_ready(out)

    ref = _reference_spatial_gate(x, w1, b1, w2, b2)
    assert out.shape == (N, C, H, W)
    assert jnp.allclose(out, ref, atol=1e-5, rtol=1e-5), \
        float(jnp.max(jnp.abs(out - ref)))

    print("KERNEL_OK")
</pallas_src>

<mosaic_0001>
module attributes {stable_mosaic.version = 11 : i64} {
  func.func @_spatial_gate_kernel(%arg0: i32, %arg1: memref<1x32x256xf32, #tpu.memory_space<vmem>>, %arg2: memref<32x2xf32, #tpu.memory_space<vmem>>, %arg3: memref<1x2xf32, #tpu.memory_space<vmem>>, %arg4: memref<32x2xf32, #tpu.memory_space<vmem>>, %arg5: memref<32x1xf32, #tpu.memory_space<vmem>>, %arg6: memref<1x32x256xf32, #tpu.memory_space<vmem>>) attributes {dimension_semantics = [#tpu.dimension_semantics<parallel>], iteration_bounds = array<i64: 2>, scalar_prefetch = 0 : i64, scratch_operands = 0 : i64, tpu.core_type = #tpu.core_type<tc>, window_params = [{transform_indices = @transform_0, window_bounds = array<i64: 1, 32, 256>}, {pipeline_mode = #tpu.pipeline_mode<synchronous>, transform_indices = @transform_1, window_bounds = array<i64: 32, 2>}, {pipeline_mode = #tpu.pipeline_mode<synchronous>, transform_indices = @transform_2, window_bounds = array<i64: 1, 2>}, {pipeline_mode = #tpu.pipeline_mode<synchronous>, transform_indices = @transform_3, window_bounds = array<i64: 32, 2>}, {pipeline_mode = #tpu.pipeline_mode<synchronous>, transform_indices = @transform_4, window_bounds = array<i64: 32, 1>}, {transform_indices = @transform_5, window_bounds = array<i64: 1, 32, 256>}]} {
    %c0 = arith.constant 0 : index
    %c0_0 = arith.constant 0 : index
    %c0_1 = arith.constant 0 : index
    %0 = vector.load %arg1[%c0, %c0_0, %c0_1] : memref<1x32x256xf32, #tpu.memory_space<vmem>>, vector<1x32x256xf32>
    %1 = vector.shape_cast %0 : vector<1x32x256xf32> to vector<32x256xf32>
    %cst = arith.constant dense<0.000000e+00> : vector<32xf32>
    %2 = vector.multi_reduction <add>, %1, %cst [1] : vector<32x256xf32> to vector<32xf32>
    %3 = vector.shape_cast %2 : vector<32xf32> to vector<32x1xf32>
    %cst_2 = arith.constant 3.906250e-03 : f32
    %4 = vector.broadcast %cst_2 : f32 to vector<32x1xf32>
    %5 = arith.mulf %3, %4 : vector<32x1xf32>
    %c0_3 = arith.constant 0 : index
    %c0_4 = arith.constant 0 : index
    %6 = vector.load %arg2[%c0_3, %c0_4] : memref<32x2xf32, #tpu.memory_space<vmem>>, vector<32x2xf32>
    %7 = vector.broadcast %5 : vector<32x1xf32> to vector<32x2xf32>
    %8 = arith.mulf %6, %7 : vector<32x2xf32>
    %cst_5 = arith.constant dense<0.000000e+00> : vector<2xf32>
    %9 = vector.multi_reduction <add>, %8, %cst_5 [0] : vector<32x2xf32> to vector<2xf32>
    %10 = vector.shape_cast %9 : vector<2xf32> to vector<1x2xf32>
    %c0_6 = arith.constant 0 : index
    %c0_7 = arith.constant 0 : index
    %11 = vector.load %arg3[%c0_6, %c0_7] : memref<1x2xf32, #tpu.memory_space<vmem>>, vector<1x2xf32>
    %12 = arith.addf %10, %11 : vector<1x2xf32>
    %cst_8 = arith.constant 0.000000e+00 : f32
    %13 = vector.broadcast %cst_8 : f32 to vector<1x2xf32>
    %14 = arith.maximumf %12, %13 : vector<1x2xf32>
    %c0_9 = arith.constant 0 : index
    %c0_10 = arith.constant 0 : index
    %15 = vector.load %arg4[%c0_9, %c0_10] : memref<32x2xf32, #tpu.memory_space<vmem>>, vector<32x2xf32>
    %16 = vector.broadcast %14 : vector<1x2xf32> to vector<32x2xf32>
    %17 = arith.mulf %15, %16 : vector<32x2xf32>
    %cst_11 = arith.constant dense<0.000000e+00> : vector<32xf32>
    %18 = vector.multi_reduction <add>, %17, %cst_11 [1] : vector<32x2xf32> to vector<32xf32>
    %19 = vector.shape_cast %18 : vector<32xf32> to vector<32x1xf32>
    %c0_12 = arith.constant 0 : index
    %c0_13 = arith.constant 0 : index
    %20 = vector.load %arg5[%c0_12, %c0_13] : memref<32x1xf32, #tpu.memory_space<vmem>>, vector<32x1xf32>
    %21 = arith.addf %19, %20 : vector<32x1xf32>
    %cst_14 = arith.constant 0.000000e+00 : f32
    %22 = vector.broadcast %cst_14 : f32 to vector<32x1xf32>
    %23 = arith.subf %22, %21 : vector<32x1xf32>
    %24 = math.exp %23 : vector<32x1xf32>
    %cst_15 = arith.constant 1.000000e+00 : f32
    %25 = vector.broadcast %cst_15 : f32 to vector<32x1xf32>
    %26 = arith.addf %25, %24 : vector<32x1xf32>
    %cst_16 = arith.constant 1.000000e+00 : f32
    %27 = vector.broadcast %cst_16 : f32 to vector<32x1xf32>
    %28 = arith.divf %27, %26 : vector<32x1xf32>
    %29 = vector.broadcast %28 : vector<32x1xf32> to vector<32x256xf32>
    %30 = arith.mulf %1, %29 : vector<32x256xf32>
    %c0_17 = arith.constant 0 : index
    %c0_18 = arith.constant 0 : index
    %c0_19 = arith.constant 0 : index
    %31 = vector.load %arg6[%c0_17, %c0_18, %c0_19] : memref<1x32x256xf32, #tpu.memory_space<vmem>>, vector<1x32x256xf32>
    %32 = vector.shape_cast %31 : vector<1x32x256xf32> to vector<32x256xf32>
    %33 = vector.shape_cast %30 : vector<32x256xf32> to vector<1x32x256xf32>
    tpu.vector_store %arg6[%c0_17, %c0_18, %c0_19], %33 {strides = array<i32>} : memref<1x32x256xf32, #tpu.memory_space<vmem>>, vector<1x32x256xf32>,
    return
  }
  func.func @transform_0(%arg0: i32) -> (i32, i32, i32) {
    %c0_i32 = arith.constant 0 : i32
    %c0_i32_0 = arith.constant 0 : i32
    %c0_i32_1 = arith.constant 0 : i32
    return %arg0, %c0_i32, %c0_i32_0 : i32, i32, i32
  }
  func.func @transform_1(%arg0: i32) -> (i32, i32) {
    %c0_i32 = arith.constant 0 : i32
    %c0_i32_0 = arith.constant 0 : i32
    %c0_i32_1 = arith.constant 0 : i32
    return %c0_i32, %c0_i32_0 : i32, i32
  }
  func.func @transform_2(%arg0: i32) -> (i32, i32) {
    %c0_i32 = arith.constant 0 : i32
    %c0_i32_0 = arith.constant 0 : i32
    %c0_i32_1 = arith.constant 0 : i32
    return %c0_i32, %c0_i32_0 : i32, i32
  }
  func.func @transform_3(%arg0: i32) -> (i32, i32) {
    %c0_i32 = arith.constant 0 : i32
    %c0_i32_0 = arith.constant 0 : i32
    %c0_i32_1 = arith.constant 0 : i32
    return %c0_i32, %c0_i32_0 : i32, i32
  }
  func.func @transform_4(%arg0: i32) -> (i32, i32) {
    %c0_i32 = arith.constant 0 : i32
    %c0_i32_0 = arith.constant 0 : i32
    %c0_i32_1 = arith.constant 0 : i32
    return %c0_i32, %c0_i32_0 : i32, i32
  }
  func.func @transform_5(%arg0: i32) -> (i32, i32, i32) {
    %c0_i32 = arith.constant 0 : i32
    %c0_i32_0 = arith.constant 0 : i32
    %c0_i32_1 = arith.constant 0 : i32
    return %arg0, %c0_i32, %c0_i32_0 : i32, i32, i32
  }
}

</mosaic_0001>

<llo_original>
// kernel: tpu_custom_call.1
$region0: #{tpu_custom_call.1}
  #allocation0 [shape = 'u32[]', space=smem, size = 0x4, offset = 0x4, fixed_abs, tag = 'smem constant byte address 0x4 - core index']
  #allocation1 [shape = 'u32[72,128]{1,0:T(1,128)}', space=vmem, size = 0x9000, scoped, tag = 'internal scratch']
  %s0 = inlined_call_operand.hbm [shape: f32[2,32,256], index: 0, kind: input, shape index: {}]
  %s1 = inlined_call_operand.vmem [shape: f32[32,2], index: 1, kind: input, shape index: {}]
  %s2 = inlined_call_operand.vmem [shape: f32[1,2], index: 2, kind: input, shape index: {}]
  %s3 = inlined_call_operand.vmem [shape: f32[32,2], index: 3, kind: input, shape index: {}]
  %s4 = inlined_call_operand.vmem [shape: f32[32,1], index: 4, kind: input, shape index: {}]
  %s5 = inlined_call_operand.hbm [shape: f32[2,32,256], index: 5, kind: output, shape index: {}]
  %s6 = sld [smem:[#allocation0]]
  $region57: #{tpu_custom_call.1} parent=0
    _
  %s8 = ssub.s32 1, %s6
  %s9 = scalar_select 0, %s8, %s6
  $region1: #{tpu_custom_call.1} parent=0
    #allocation2 [shape = 'u8[65536]{0}', space=vmem, size = 0x10000, scoped, tag = 'input window, operand 0']
    #allocation3 [shape = 's32[2]{0}', space=sflag, size = 0x8, scoped, tag = 'scoped memory for tpu_custom_call.1']
    #allocation4 [shape = 's32[2]{0}', space=sflag, size = 0x8, scoped, tag = 'scoped memory for tpu_custom_call.1']
    #allocation5 [shape = 'u8[65536]{0}', space=vmem, size = 0x10000, scoped, tag = 'output window, operand 0']
    %10 = vsyncpa [#allocation3], 0
    %s11 = scalar_lea.sflag [#allocation3], 1
    %12 = vsyncpa %s11, 0
    %13 = vsyncpa [#allocation4], 0
    %s14 = scalar_lea.sflag [#allocation4], 1
    %15 = vsyncpa %s14, 0
    loop: start=0, step=1, limit=4
    $region2: #{tpu_custom_call.1} parent=1 // loop_pre_header
      _
    $region3: #{tpu_custom_call.1} parent=1 // loop_header
      %s17 = sphi 0, %s21
      %p18 = scmp.ge.s32.totalorder %s17, 4
      %s27 = sphi 0, %s29
      %s30 = sphi 0, %s27
      %s31 = sphi 0, %s30
      %s47 = sphi 0, %s31
      %s51 = sphi 0, %s51
      %s53 = sphi 0, %s51
      %s54 = sphi 0, %s53
      %s68 = sphi 0, %s54
      %s72 = sphi 0, %s72
      %s74 = sphi 0, %s72
      %s75 = sphi 0, %s74
      %s89 = sphi 0, %s75
      %s93 = sphi 0, %s93
      %s95 = sphi 0, %s93
      %s96 = sphi 0, %s95
      %s110 = sphi 0, %s96
      %s114 = sphi 0, %s114
      %s116 = sphi 0, %s114
      %s117 = sphi 0, %s116
      %s131 = sphi 0, %s117
      %s137 = sphi 0, %s139
      %s140 = sphi 0, %s137
      %s141 = sphi 0, %s140
      %s157 = sphi 0, %s141
    $region4: #{tpu_custom_call.1} parent=1 // loop_header_branch
      %20 = sbr.rel (%p18) target = $region8
    $region5: #{tpu_custom_call.1} parent=1 // loop_body
      %s22 = ssub.s32 %s17, 1
      %s23 = ssub.s32 %s17, 2
      %s24 = sadd.s32 %s17, 1
      %s25 = ssub.s32 %s17, %s24
      %p26 = scmp.eq.s32.totalorder %s25, 0
      %s28 = sadd.s32 %s27, 1
      %s29 = scalar_select %p26, %s27, %s28
      %p32 = pneg %p26
      %p33 = scmp.eq.s32.totalorder %s17, 1
      %p34 = por %p32, %p33
      %p35 = scmp.ne.s32.totalorder %s27, %s30
      %p36 = scmp.eq.s32.totalorder %s17, 0
      %p37 = por %p35, %p36
      %p38 = scmp.ne.s32.totalorder %s27, %s30
      %p39 = scmp.eq.s32.totalorder %s22, 1
      %p40 = por %p38, %p39
      %p41 = scmp.ne.s32.totalorder %s30, %s31
      %p42 = scmp.eq.s32.totalorder %s22, 0
      %p43 = por %p41, %p42
      %p44 = scmp.ne.s32.totalorder %s30, %s31
      %p45 = scmp.eq.s32.totalorder %s23, 1
      %p46 = por %p44, %p45
      %p48 = scmp.ne.s32.totalorder %s31, %s47
      %p49 = scmp.eq.s32.totalorder %s23, 0
      %p50 = por %p48, %p49
      %s52 = sadd.s32 %s51, 1
      %p55 = scmp.eq.s32.totalorder %s17, 1
      %p56 = scmp.ne.s32.totalorder %s51, %s53
      %p57 = scmp.eq.s32.totalorder %s17, 0
      %p58 = por %p56, %p57
      %p59 = scmp.ne.s32.totalorder %s51, %s53
      %p60 = scmp.eq.s32.totalorder %s22, 1
      %p61 = por %p59, %p60
      %p62 = scmp.ne.s32.totalorder %s53, %s54
      %p63 = scmp.eq.s32.totalorder %s22, 0
      %p64 = por %p62, %p63
      %p65 = scmp.ne.s32.totalorder %s53, %s54
      %p66 = scmp.eq.s32.totalorder %s23, 1
      %p67 = por %p65, %p66
      %p69 = scmp.ne.s32.totalorder %s54, %s68
      %p70 = scmp.eq.s32.totalorder %s23, 0
      %p71 = por %p69, %p70
      %s73 = sadd.s32 %s72, 1
      %p76 = scmp.eq.s32.totalorder %s17, 1
      %p77 = scmp.ne.s32.totalorder %s72, %s74
      %p78 = scmp.eq.s32.totalorder %s17, 0
      %p79 = por %p77, %p78
      %p80 = scmp.ne.s32.totalorder %s72, %s74
      %p81 = scmp.eq.s32.totalorder %s22, 1
      %p82 = por %p80, %p81
      %p83 = scmp.ne.s32.totalorder %s74, %s75
      %p84 = scmp.eq.s32.totalorder %s22, 0
      %p85 = por %p83, %p84
      %p86 = scmp.ne.s32.totalorder %s74, %s75
      %p87 = scmp.eq.s32.totalorder %s23, 1
      %p88 = por %p86, %p87
      %p90 = scmp.ne.s32.totalorder %s75, %s89
      %p91 = scmp.eq.s32.totalorder %s23, 0
      %p92 = por %p90, %p91
      %s94 = sadd.s32 %s93, 1
      %p97 = scmp.eq.s32.totalorder %s17, 1
      %p98 = scmp.ne.s32.totalorder %s93, %s95
      %p99 = scmp.eq.s32.totalorder %s17, 0
      %p100 = por %p98, %p99
      %p101 = scmp.ne.s32.totalorder %s93, %s95
      %p102 = scmp.eq.s32.totalorder %s22, 1
      %p103 = por %p101, %p102
      %p104 = scmp.ne.s32.totalorder %s95, %s96
      %p105 = scmp.eq.s32.totalorder %s22, 0
      %p106 = por %p104, %p105
      %p107 = scmp.ne.s32.totalorder %s95, %s96
      %p108 = scmp.eq.s32.totalorder %s23, 1
      %p109 = por %p107, %p108
      %p111 = scmp.ne.s32.totalorder %s96, %s110
      %p112 = scmp.eq.s32.totalorder %s23, 0
      %p113 = por %p111, %p112
      %s115 = sadd.s32 %s114, 1
      %p118 = scmp.eq.s32.totalorder %s17, 1
      %p119 = scmp.ne.s32.totalorder %s114, %s116
      %p120 = scmp.eq.s32.totalorder %s17, 0
      %p121 = por %p119, %p120
      %p122 = scmp.ne.s32.totalorder %s114, %s116
      %p123 = scmp.eq.s32.totalorder %s22, 1
      %p124 = por %p122, %p123
      %p125 = scmp.ne.s32.totalorder %s116, %s117
      %p126 = scmp.eq.s32.totalorder %s22, 0
      %p127 = por %p125, %p126
      %p128 = scmp.ne.s32.totalorder %s116, %s117
      %p129 = scmp.eq.s32.totalorder %s23, 1
      %p130 = por %p128, %p129
      %p132 = scmp.ne.s32.totalorder %s117, %s131
      %p133 = scmp.eq.s32.totalorder %s23, 0
      %p134 = por %p132, %p133
      %s135 = ssub.s32 %s17, %s24
      %p136 = scmp.eq.s32.totalorder %s135, 0
      %s138 = sadd.s32 %s137, 1
      %s139 = scalar_select %p136, %s137, %s138
      %p142 = pneg %p136
      %p143 = scmp.eq.s32.totalorder %s17, 1
      %p144 = por %p142, %p143
      %p145 = scmp.ne.s32.totalorder %s137, %s140
      %p146 = scmp.eq.s32.totalorder %s17, 0
      %p147 = por %p145, %p146
      %p148 = scmp.ne.s32.totalorder %s137, %s140
      %p149 = scmp.eq.s32.totalorder %s22, 1
      %p150 = por %p148, %p149
      %p151 = scmp.ne.s32.totalorder %s140, %s141
      %p152 = scmp.eq.s32.totalorder %s22, 0
      %p153 = por %p151, %p152
      %p154 = scmp.ne.s32.totalorder %s140, %s141
      %p155 = scmp.eq.s32.totalorder %s23, 1
      %p156 = por %p154, %p155
      %p158 = scmp.ne.s32.totalorder %s141, %s157
      %p159 = scmp.eq.s32.totalorder %s23, 0
      %p160 = por %p158, %p159
      %p161 = scmp.le.s32.totalorder 1, %s17
      %p162 = scmp.lt.s32.totalorder %s17, 3
      %p163 = pnand %p161, %p162
      %p164 = pneg %p163
      // Predicated region
      $region9: #{tpu_custom_call.1} parent=5 // pred_check
        _
      $region10: #{tpu_custom_call.1} parent=5 // pred_check_branch
        %166 = sbr.rel (%p163) target = $region12
      $region11: #{tpu_custom_call.1} parent=5 // pred_region
        %s167 = ssub.s32 %s17, 1
        // Predicated region
        $region13: #{tpu_custom_call.1} parent=11 // pred_check
          %p168 = pneg %p64
        $region14: #{tpu_custom_call.1} parent=11 // pred_check_branch
          %170 = sbr.rel (%p168) target = $region16
        $region15: #{tpu_custom_call.1} parent=11 // pred_region
          _
        $region16: #{tpu_custom_call.1} parent=11 // pred_fallthru
          _
        // Predicated region
        $region17: #{tpu_custom_call.1} parent=11 // pred_check
          %p171 = pneg %p85
        $region18: #{tpu_custom_call.1} parent=11 // pred_check_branch
          %173 = sbr.rel (%p171) target = $region20
        $region19: #{tpu_custom_call.1} parent=11 // pred_region
          _
        $region20: #{tpu_custom_call.1} parent=11 // pred_fallthru
          _
        // Predicated region
        $region21: #{tpu_custom_call.1} parent=11 // pred_check
          %p174 = pneg %p106
        $region22: #{tpu_custom_call.1} parent=11 // pred_check_branch
          %176 = sbr.rel (%p174) target = $region24
        $region23: #{tpu_custom_call.1} parent=11 // pred_region
          _
        $region24: #{tpu_custom_call.1} parent=11 // pred_fallthru
          _
        // Predicated region
        $region25: #{tpu_custom_call.1} parent=11 // pred_check
          %p177 = pneg %p127
        $region26: #{tpu_custom_call.1} parent=11 // pred_check_branch
          %179 = sbr.rel (%p177) target = $region28
        $region27: #{tpu_custom_call.1} parent=11 // pred_region
          _
        $region28: #{tpu_custom_call.1} parent=11 // pred_fallthru
          _
      $region12: #{tpu_custom_call.1} parent=5 // pred_fallthru
        _
      %p180 = scmp.lt.s32.totalorder %s17, 2
      // Predicated region
      $region29: #{tpu_custom_call.1} parent=5 // pred_check
        %p181 = pneg %p180
      $region30: #{tpu_custom_call.1} parent=5 // pred_check_branch
        %183 = sbr.rel (%p181) target = $region32
      $region31: #{tpu_custom_call.1} parent=5 // pred_region
        // Predicated region
        $region33: #{tpu_custom_call.1} parent=31 // pred_check
          %p184 = pneg %p37
        $region34: #{tpu_custom_call.1} parent=31 // pred_check_branch
          %186 = sbr.rel (%p184) target = $region36
        $region35: #{tpu_custom_call.1} parent=31 // pred_region
          %s187 = sand.u32 %s27, 1
          %s188 = scalar_lea.sflag [#allocation3], %s187
          %s189 = sand.u32 %s27, 1
          %s190 = smul.addr %s189, 64
          %s191 = scalar_lea.vmem [#allocation2], %s190
          %193 = vsyncadd %s188, 0
          %s194 = smul.addr %s17, 8
          %s195 = smul.addr %s194, 8
          %s196 = scalar_lea.hbm %s0, %s195
          %s197 = sshll.u32 %s196, 4
          %s198 = int_to_ptr.hbm [resolvable:$true] %s197
          %s199 = sshll.u32 %s191, 4
          %s200 = int_to_ptr.vmem [resolvable:$true] %s199
          %205 = dma.hbm_to_vmem [thread:$0]  %s198, 1024, %s200, %s188, 256, 256, 16
        $region36: #{tpu_custom_call.1} parent=31 // pred_fallthru
          _
      $region32: #{tpu_custom_call.1} parent=5 // pred_fallthru
        _
      %p206 = scmp.le.s32.totalorder 1, %s17
      %p207 = scmp.lt.s32.totalorder %s17, 3
      %p208 = pnand %p206, %p207
      %p209 = pneg %p208
      // Predicated region
      $region37: #{tpu_custom_call.1} parent=5 // pred_check
        _
      $region38: #{tpu_custom_call.1} parent=5 // pred_check_branch
        %211 = sbr.rel (%p208) target = $region40
      $region39: #{tpu_custom_call.1} parent=5 // pred_region
        %s212 = ssub.s32 %s17, 1
        %s213 = sand.u32 %s30, 1
        %s214 = scalar_lea.sflag [#allocation3], %s213
        %s215 = sand.u32 %s30, 1
        %s216 = smul.addr %s215, 64
        %s217 = scalar_lea.vmem [#allocation2], %s216
        // Predicated region
        $region41: #{tpu_custom_call.1} parent=39 // pred_check
          %p218 = pneg %p43
        $region42: #{tpu_custom_call.1} parent=39 // pred_check_branch
          %220 = sbr.rel (%p218) target = $region44
        $region43: #{tpu_custom_call.1} parent=39 // pred_region
          %222 = dma.done %s214, 1024
        $region44: #{tpu_custom_call.1} parent=39 // pred_fallthru
          _
        %s223 = sand.u32 %s30, 1
        %s224 = scalar_lea.sflag [#allocation3], %s223
        %s225 = sand.u32 %s30, 1
        %s226 = smul.addr %s225, 64
        %s227 = scalar_lea.vmem [#allocation2], %s226
        %p228 = pneg %p43
        %p229 = pneg %p40
        %p230 = pneg %p64
        %p231 = pneg %p61
        %p232 = pneg %p85
        %p233 = pneg %p82
        %p234 = pneg %p106
        %p235 = pneg %p103
        %p236 = pneg %p127
        %p237 = pneg %p124
        %p238 = pneg %p153
        %p239 = pneg %p150
        %s240 = sand.u32 %s140, 1
        %s241 = scalar_lea.sflag [#allocation4], %s240
        %s242 = sand.u32 %s140, 1
        %s243 = smul.addr %s242, 64
        %s244 = scalar_lea.vmem [#allocation5], %s243
        %v245 = vld [vmem:[%s217] sm:$0xff]
        %v246 = vld [vmem:[%s217 + $0x8] sm:$0xff]
        %v247 = vld [vmem:[%s217 + $0x10] sm:$0xff]
        %v248 = vld [vmem:[%s217 + $0x18] sm:$0xff]
        %v249 = vld [vmem:[%s217 + $0x20] sm:$0xff]
        %v250 = vld [vmem:[%s217 + $0x28] sm:$0xff]
        %v251 = vld [vmem:[%s217 + $0x30] sm:$0xff]
        %v252 = vld [vmem:[%s217 + $0x38] sm:$0xff]
        %v253 = vadd.f32 %v245, %v246
        %254 = vadd.xlane.f32.xlu0 %v253
        %v255 = vpop.xlane.xlu0 %254
        %v256 = vadd.f32 %v247, %v248
        %257 = vadd.xlane.f32.xlu0 %v256
        %v258 = vpop.xlane.xlu0 %257
        %v259 = vadd.f32 %v249, %v250
        %260 = vadd.xlane.f32.xlu0 %v259
        %v261 = vpop.xlane.xlu0 %260
        %v262 = vadd.f32 %v251, %v252
        %263 = vadd.xlane.f32.xlu0 %v262
        %v264 = vpop.xlane.xlu0 %263
        %v265 = vmul.f32 %v255, 0.00390625
        %v266 = vmul.f32 %v258, 0.00390625
        %v267 = vmul.f32 %v261, 0.00390625
        %v268 = vmul.f32 %v264, 0.00390625
        %v269 = vld [vmem:[%s1] sm:$0xff]
        %v270 = vld [vmem:[%s1 + $0x8] sm:$0xff]
        %v271 = vld [vmem:[%s1 + $0x10] sm:$0xff]
        %v272 = vld [vmem:[%s1 + $0x18] sm:$0xff]
        %v273 = vmul.f32 %v269, %v265
        %v274 = vmul.f32 %v270, %v266
        %v275 = vmul.f32 %v271, %v267
        %v276 = vmul.f32 %v272, %v268
        %vm277 = vcmask 15360
        %v278 = vsel %vm277, %v273, 0.0
        %v279 = vsel %vm277, %v274, 0.0
        %v280 = vadd.f32 %v278, %v279
        %v281 = vsel %vm277, %v275, 0.0
        %v282 = vadd.f32 %v280, %v281
        %v283 = vsel %vm277, %v276, 0.0
        %v284 = vadd.f32 %v282, %v283
        %v285 = vrot.slane %v284, 4
        %v286 = vadd.f32 %v284, %v285
        %v287 = vrot.slane %v286, 2
        %v288 = vadd.f32 %v286, %v287
        %v289 = vrot.slane %v288, 1
        %v290 = vadd.f32 %v288, %v289
        %v291 = vld [vmem:[%s2] sm:$0x1]
        %v292 = vadd.f32 %v290, %v291
        %v293 = vmax.f32 %v292, 0.0
        %v294 = vld [vmem:[%s3] sm:$0xff]
        %v295 = vld [vmem:[%s3 + $0x8] sm:$0xff]
        %v296 = vld [vmem:[%s3 + $0x10] sm:$0xff]
        %v297 = vld [vmem:[%s3 + $0x18] sm:$0xff]
        %v298 = vperm.slane %v293, 0
        %v299 = vmul.f32 %v294, %v298
        %v300 = vmul.f32 %v295, %v298
        %v301 = vmul.f32 %v296, %v298
        %v302 = vmul.f32 %v297, %v298
        %v303 = vsel %vm277, %v299, 0.0
        %304 = vadd.xlane.f32.xlu0 %v303
        %v305 = vpop.xlane.xlu0 %304
        %v306 = vsel %vm277, %v300, 0.0
        %307 = vadd.xlane.f32.xlu0 %v306
        %v308 = vpop.xlane.xlu0 %307
        %v309 = vsel %vm277, %v301, 0.0
        %310 = vadd.xlane.f32.xlu0 %v309
        %v311 = vpop.xlane.xlu0 %310
        %v312 = vsel %vm277, %v302, 0.0
        %313 = vadd.xlane.f32.xlu0 %v312
        %v314 = vpop.xlane.xlu0 %313
        %v315 = vld [vmem:[%s4] sm:$0xff]
        %v316 = vld [vmem:[%s4 + $0x8] sm:$0xff]
        %v317 = vld [vmem:[%s4 + $0x10] sm:$0xff]
        %v318 = vld [vmem:[%s4 + $0x18] sm:$0xff]
        %v319 = vadd.f32 %v305, %v315
        %v320 = vadd.f32 %v308, %v316
        %v321 = vadd.f32 %v311, %v317
        %v322 = vadd.f32 %v314, %v318
        %v323 = vsub.f32 0.0, %v319
        %v324 = vsub.f32 0.0, %v320
        %v325 = vsub.f32 0.0, %v321
        %v326 = vsub.f32 0.0, %v322
        %v327 = vmul.f32 %v323, 1.442695
        %v328 = vpow.pop %v327
        %v329 = vmul.f32 %v324, 1.442695
        %v330 = vpow.pop %v329
        %v331 = vmul.f32 %v325, 1.442695
        %v332 = vpow.pop %v331
        %v333 = vmul.f32 %v326, 1.442695
        %v334 = vpow.pop %v333
        %v335 = vadd.f32 %v328, 1.0
        %v336 = vadd.f32 %v330, 1.0
        %v337 = vadd.f32 %v332, 1.0
        %v338 = vadd.f32 %v334, 1.0
        %v339 = vrcp.pop %v335
        %v340 = vmul.f32 %v335, %v339
        %v341 = vsub.f32 1.0, %v340
        %v342 = vmul.f32 %v339, %v341
        %v343 = vadd.f32 %v339, %v342
        %vm344 = vweird.f32 %v335
        %vm345 = vweird.f32 %v339
        %vm346 = vmor %vm344, %vm345
        %v347 = vsel %vm346, %v339, %v343
        %v348 = vand.u32 2147483647, %v335
        %vm349 = vcmp.eq.f32.partialorder %v348, 8.507059e+37
        %v350 = vand.u32 %v335, 2147483648
        %v351 = vor.u32 1.1754944e-38, %v350
        %v352 = vsel %vm349, %v351, %v347
        %v353 = vmul.f32 1.0, %v352
        %v354 = vrcp.pop %v336
        %v355 = vmul.f32 %v336, %v354
        %v356 = vsub.f32 1.0, %v355
        %v357 = vmul.f32 %v354, %v356
        %v358 = vadd.f32 %v354, %v357
        %vm359 = vweird.f32 %v336
        %vm360 = vweird.f32 %v354
        %vm361 = vmor %vm359, %vm360
        %v362 = vsel %vm361, %v354, %v358
        %v363 = vand.u32 2147483647, %v336
        %vm364 = vcmp.eq.f32.partialorder %v363, 8.507059e+37
        %v365 = vand.u32 %v336, 2147483648
        %v366 = vor.u32 1.1754944e-38, %v365
        %v367 = vsel %vm364, %v366, %v362
        %v368 = vmul.f32 1.0, %v367
        %v369 = vrcp.pop %v337
        %v370 = vmul.f32 %v337, %v369
        %v371 = vsub.f32 1.0, %v370
        %v372 = vmul.f32 %v369, %v371
        %v373 = vadd.f32 %v369, %v372
        %vm374 = vweird.f32 %v337
        %vm375 = vweird.f32 %v369
        %vm376 = vmor %vm374, %vm375
        %v377 = vsel %vm376, %v369, %v373
        %v378 = vand.u32 2147483647, %v337
        %vm379 = vcmp.eq.f32.partialorder %v378, 8.507059e+37
        %v380 = vand.u32 %v337, 2147483648
        %v381 = vor.u32 1.1754944e-38, %v380
        %v382 = vsel %vm379, %v381, %v377
        %v383 = vmul.f32 1.0, %v382
        %v384 = vrcp.pop %v338
        %v385 = vmul.f32 %v338, %v384
        %v386 = vsub.f32 1.0, %v385
        %v387 = vmul.f32 %v384, %v386
        %v388 = vadd.f32 %v384, %v387
        %vm389 = vweird.f32 %v338
        %vm390 = vweird.f32 %v384
        %vm391 = vmor %vm389, %vm390
        %v392 = vsel %vm391, %v384, %v388
        %v393 = vand.u32 2147483647, %v338
        %vm394 = vcmp.eq.f32.partialorder %v393, 8.507059e+37
        %v395 = vand.u32 %v338, 2147483648
        %v396 = vor.u32 1.1754944e-38, %v395
        %v397 = vsel %vm394, %v396, %v392
        %v398 = vmul.f32 1.0, %v397
        %400 = vset.pattern.permute.xlu0 0
        %401 = vperm.xlu0 %400, %v353
        %v402 = vpop.permute.xlu0 %401
        %405 = vset.pattern.permute.xlu0 0
        %406 = vperm.xlu0 %405, %v368
        %v407 = vpop.permute.xlu0 %406
        %410 = vset.pattern.permute.xlu0 0
        %411 = vperm.xlu0 %410, %v383
        %v412 = vpop.permute.xlu0 %411
        %415 = vset.pattern.permute.xlu0 0
        %416 = vperm.xlu0 %415, %v398
        %v417 = vpop.permute.xlu0 %416
        %v419 = vmul.f32 %v245, %v402
        %v420 = vmul.f32 %v246, %v402
        %v421 = vmul.f32 %v247, %v407
        %v422 = vmul.f32 %v248, %v407
        %v423 = vmul.f32 %v249, %v412
        %v424 = vmul.f32 %v250, %v412
        %v425 = vmul.f32 %v251, %v417
        %v426 = vmul.f32 %v252, %v417
        %427 = vst [vmem:[%s244] sm:$0xff] %v419
        %428 = vst [vmem:[%s244 + $0x8] sm:$0xff] %v420
        %429 = vst [vmem:[%s244 + $0x10] sm:$0xff] %v421
        %430 = vst [vmem:[%s244 + $0x18] sm:$0xff] %v422
        %431 = vst [vmem:[%s244 + $0x20] sm:$0xff] %v423
        %432 = vst [vmem:[%s244 + $0x28] sm:$0xff] %v424
        %433 = vst [vmem:[%s244 + $0x30] sm:$0xff] %v425
        %434 = vst [vmem:[%s244 + $0x38] sm:$0xff] %v426
        %s435 = sand.u32 %s140, 1
        %s436 = scalar_lea.sflag [#allocation4], %s435
        %s437 = sand.u32 %s140, 1
        %s438 = smul.addr %s437, 64
        %s439 = scalar_lea.vmem [#allocation5], %s438
        // Predicated region
        $region45: #{tpu_custom_call.1} parent=39 // pred_check
          %p440 = pneg %p150
        $region46: #{tpu_custom_call.1} parent=39 // pred_check_branch
          %442 = sbr.rel (%p440) target = $region48
        $region47: #{tpu_custom_call.1} parent=39 // pred_region
          %444 = vsyncadd %s436, 0
          %s445 = smul.addr %s22, 8
          %s446 = smul.addr %s445, 8
          %s447 = scalar_lea.hbm %s5, %s446
          %s448 = sshll.u32 %s439, 4
          %s449 = int_to_ptr.vmem [resolvable:$true] %s448
          %s450 = sshll.u32 %s447, 4
          %s451 = int_to_ptr.hbm [resolvable:$true] %s450
          %456 = dma.vmem_to_hbm [thread:$0]  %s449, 1024, %s451, %s436, 256, 256, 16
        $region48: #{tpu_custom_call.1} parent=39 // pred_fallthru
          _
      $region40: #{tpu_custom_call.1} parent=5 // pred_fallthru
        _
      %p457 = scmp.le.s32.totalorder 2, %s17
      // Predicated region
      $region49: #{tpu_custom_call.1} parent=5 // pred_check
        %p458 = pneg %p457
      $region50: #{tpu_custom_call.1} parent=5 // pred_check_branch
        %460 = sbr.rel (%p458) target = $region52
      $region51: #{tpu_custom_call.1} parent=5 // pred_region
        %s461 = ssub.s32 %s17, 2
        // Predicated region
        $region53: #{tpu_custom_call.1} parent=51 // pred_check
          %p462 = pneg %p156
        $region54: #{tpu_custom_call.1} parent=51 // pred_check_branch
          %464 = sbr.rel (%p462) target = $region56
        $region55: #{tpu_custom_call.1} parent=51 // pred_region
          %s465 = sand.u32 %s141, 1
          %s466 = scalar_lea.sflag [#allocation4], %s465
          %s467 = sand.u32 %s141, 1
          %s468 = smul.addr %s467, 64
          %s469 = scalar_lea.vmem [#allocation5], %s468
          %471 = dma.done %s466, 1024
        $region56: #{tpu_custom_call.1} parent=51 // pred_fallthru
          _
      $region52: #{tpu_custom_call.1} parent=5 // pred_fallthru
        _
    $region6: #{tpu_custom_call.1} parent=1 // loop_footer
      %s21 = sadd.s32 1, %s17
    $region7: #{tpu_custom_call.1} parent=1 // loop_footer_branch
      %16 = sbr.rel target = $region3
    $region8: #{tpu_custom_call.1} parent=1 // loop_exit
      _
    %472 = vsyncpa [#allocation3], 1
    %s473 = scalar_lea.sflag [#allocation3], 1
    %474 = vsyncpa %s473, 1
    %475 = vsyncpa [#allocation4], 1
    %s476 = scalar_lea.sflag [#allocation4], 1
    %477 = vsyncpa %s476, 1

</llo_original>
